<compile_context>
chip_gen: v5e
topology: v5e:2x2
jax: 0.10.0
libtpu: 0.0.40
codegen_flags: <defaults>
</compile_context>

<pallas_src>
import functools

import numpy as np
import jax
import jax.numpy as jnp
from jax.experimental import pallas as pl
from jax.experimental.pallas import tpu as pltpu


# ---------------------------------------------------------------------------
# JPEG constants (standard IJG tables) and parameter construction (numpy)
# ---------------------------------------------------------------------------
_LUMA_Q = np.array(
    [[16, 11, 10, 16, 24, 40, 51, 61],
     [12, 12, 14, 19, 26, 58, 60, 55],
     [14, 13, 16, 24, 40, 57, 69, 56],
     [14, 17, 22, 29, 51, 87, 80, 62],
     [18, 22, 37, 56, 68, 109, 103, 77],
     [24, 35, 55, 64, 81, 104, 113, 92],
     [49, 64, 78, 87, 103, 121, 120, 101],
     [72, 92, 95, 98, 112, 100, 103, 99]], dtype=np.float64)

_CHROMA_Q = np.array(
    [[17, 18, 24, 47, 99, 99, 99, 99],
     [18, 21, 26, 66, 99, 99, 99, 99],
     [24, 26, 56, 99, 99, 99, 99, 99],
     [47, 66, 99, 99, 99, 99, 99, 99],
     [99, 99, 99, 99, 99, 99, 99, 99],
     [99, 99, 99, 99, 99, 99, 99, 99],
     [99, 99, 99, 99, 99, 99, 99, 99],
     [99, 99, 99, 99, 99, 99, 99, 99]], dtype=np.float64)

_RGB2Y = (0.299, 0.587, 0.114)
_RGB2CB = (-0.168736, -0.331264, 0.5)
_RGB2CR = (0.5, -0.418688, -0.081312)


def _dct8() -> np.ndarray:
    """Orthonormal 8-point DCT-II matrix D (2D DCT of a block X is D @ X @ D.T)."""
    k = np.arange(8).reshape(8, 1)
    n = np.arange(8).reshape(1, 8)
    D = np.cos((2 * n + 1) * k * np.pi / 16.0)
    scale = np.full((8, 1), np.sqrt(2.0 / 8.0))
    scale[0, 0] = np.sqrt(1.0 / 8.0)
    return D * scale                       # float64


def _scaled_qtable(base: np.ndarray, quality: int) -> np.ndarray:
    """IJG quality scaling of a base quantization table (float64, 8x8)."""
    quality = max(1, min(100, int(quality)))
    scale = 5000 // quality if quality < 50 else 200 - 2 * quality
    q = np.floor((base * scale + 50.0) / 100.0)
    return np.clip(q, 1.0, 255.0)


def _block_diag_dct(size: int) -> np.ndarray:
    """Block-diagonal 8-point DCT matrix of shape (size, size), size % 8 == 0."""
    assert size % 8 == 0
    D = _dct8()
    M = np.zeros((size, size), dtype=np.float64)
    for i in range(size // 8):
        M[i * 8:(i + 1) * 8, i * 8:(i + 1) * 8] = D
    return M


# ---------------------------------------------------------------------------
# Pallas kernel: one (image, row band, column band) natural NCHW tile per step.
# ---------------------------------------------------------------------------
def _jpeg_kernel(x_ref, lf_ref, li_ref, rf_ref, ri_ref, iq_ref, q_ref, o_ref):
    lf = lf_ref[...]   # (th, th) bf16: block-diag D    -> vertical forward DCT
    li = li_ref[...]   # (th, th) bf16: block-diag D.T  -> vertical inverse DCT
    rf = rf_ref[...]   # (tw, tw) bf16: block-diag D.T  -> horizontal forward DCT
    ri = ri_ref[...]   # (tw, tw) bf16: block-diag D    -> horizontal inverse DCT

    # clamp(x, 0, 1); the *255 uint8 scale is folded into the RGB->YCbCr
    # coefficients below (one fewer (th, tw) temporary per channel).
    r = jnp.clip(x_ref[0, 0, :, :], 0.0, 1.0)
    g = jnp.clip(x_ref[0, 1, :, :], 0.0, 1.0)
    b = jnp.clip(x_ref[0, 2, :, :], 0.0, 1.0)

    # RGB -> YCbCr (JPEG full range), Y level-shifted by -128.
    y = (_RGB2Y[0] * 255.0) * r + (_RGB2Y[1] * 255.0) * g \
        + (_RGB2Y[2] * 255.0) * b - 128.0
    cb = (_RGB2CB[0] * 255.0) * r + (_RGB2CB[1] * 255.0) * g \
        + (_RGB2CB[2] * 255.0) * b
    cr = (_RGB2CR[0] * 255.0) * r + (_RGB2CR[1] * 255.0) * g \
        + (_RGB2CR[2] * 255.0) * b

    def codec(plane, c):
        # Forward per-block 2D DCT = (block-diag D) @ X @ (block-diag D).T,
        # computed on the natural (rows, cols) layout -- no relayout needed.
        # bf16 MXU operands, f32 accumulation.
        coef = jnp.dot(lf, plane.astype(jnp.bfloat16),
                       preferred_element_type=jnp.float32)
        coef = jnp.dot(coef.astype(jnp.bfloat16), rf,
                       preferred_element_type=jnp.float32)
        # Quantize (reciprocal multiply -- no EUP divide) / dequantize with the
        # (8,8)-tiled tables laid out to the full tile (lane-aligned VPU ops).
        coef = jnp.round(coef * iq_ref[c]) * q_ref[c]
        # Inverse per-block 2D DCT.
        rec = jnp.dot(li, coef.astype(jnp.bfloat16),
                      preferred_element_type=jnp.float32)
        return jnp.dot(rec.astype(jnp.bfloat16), ri,
                       preferred_element_type=jnp.float32)

    y_r = codec(y, 0) + 128.0
    cb_r = codec(cb, 1)
    cr_r = codec(cr, 2)

    # YCbCr -> RGB
    rr = y_r + 1.402 * cr_r
    gg = y_r - 0.344136 * cb_r - 0.714136 * cr_r
    bb = y_r + 1.772 * cb_r

    def to_unit(v):
        # JPEG decode emits uint8; ToTensor divides by 255.  The result is
        # already in [0, 1], so the module's trailing clamp(0, 1) is a no-op.
        return jnp.round(jnp.clip(v, 0.0, 255.0)) * (1.0 / 255.0)

    o_ref[0, 0, :, :] = to_unit(rr)
    o_ref[0, 1, :, :] = to_unit(gg)
    o_ref[0, 2, :, :] = to_unit(bb)


# ---------------------------------------------------------------------------
# Wrapper: tile selection, parameter setup, pallas_call
# ---------------------------------------------------------------------------
def _pick_tile(dim: int, cap: int, unit: int) -> int:
    """Largest divisor of `dim` that is a multiple of `unit` and <= cap.

    Falls back to the full extent (always a legal block size) if none exists.
    """
    if dim <= cap:
        return dim
    d = (cap // unit) * unit
    while d >= unit:
        if dim % d == 0:
            return d
        d -= unit
    return dim


@functools.partial(jax.jit, static_argnames=("quality",))
def jpeg_forward(x: jax.Array, quality: int = 75) -> jax.Array:
    """Forward pass of the JPEG module (passthrough=True) on an NCHW batch."""
    B, C, H, W = x.shape
    assert C == 3 and H % 8 == 0 and W % 8 == 0, "expect (B,3,H,W), H,W % 8 == 0"

    xf = x.astype(jnp.float32)

    # Very wide widths that are not multiples of 128 cannot be tiled lane-
    # densely; edge-pad to the next multiple of 128 (blocks are 8 wide, so the
    # padded columns never mix with real blocks) and slice the pad off at the
    # end.  Narrow widths just use a full-width tile.
    pad_w = (-W) % 128 if (W > 512 and W % 128 != 0) else 0
    if pad_w:
        xf = jnp.pad(xf, ((0, 0), (0, 0), (0, 0), (0, pad_w)), mode="edge")
    Wp = W + pad_w

    # Tile selection: lane width a multiple of 128 (or the full width), row
    # band a multiple of 8, sized so one channel plane stays ~<= 0.5 MiB.
    # th, tw <= 256 keeps MXU FLOPs below the HBM roofline on all generations
    # and matches the 256-wide MXU of v6e/v7x.
    tw = _pick_tile(Wp, 256, 128)
    row_cap = max(8, min(256, ((1 << 19) // (tw * 4)) // 8 * 8))
    th = _pick_tile(H, row_cap, 8)
    # Guarantee >= 2 grid steps so the v7x megacore (2 TensorCores) can split
    # even a single small image.
    if B * (H // th) * (Wp // tw) < 2 and H // 8 >= 2:
        th = _pick_tile(H, max(8, H // 2), 8)

    # Block-diagonal 8-point DCT matrices for the tile (bf16 MXU operands).
    Dh = _block_diag_dct(th)
    Dw = _block_diag_dct(tw)
    lf = jnp.asarray(Dh, dtype=jnp.bfloat16)      # vertical forward:   lf @ X
    li = jnp.asarray(Dh.T, dtype=jnp.bfloat16)    # vertical inverse:   li @ C
    rf = jnp.asarray(Dw.T, dtype=jnp.bfloat16)    # horizontal forward:  X @ rf
    ri = jnp.asarray(Dw, dtype=jnp.bfloat16)      # horizontal inverse:  C @ ri

    # Quantization tables tiled to the tile shape + precomputed reciprocal.
    ql = _scaled_qtable(_LUMA_Q, quality)
    qc = _scaled_qtable(_CHROMA_Q, quality)
    q3 = np.stack([np.tile(ql, (th // 8, tw // 8)),
                   np.tile(qc, (th // 8, tw // 8)),
                   np.tile(qc, (th // 8, tw // 8))], axis=0)      # (3, th, tw)
    q_tab = jnp.asarray(q3, dtype=jnp.float32)
    inv_q = jnp.asarray(1.0 / q3, dtype=jnp.float32)

    grid = (B, H // th, Wp // tw)

    # Explicit, shape-derived scoped-VMEM budget (well under every chip's
    # physical VMEM; the 32 MiB floor comfortably covers double-buffered I/O,
    # the constant operands and the f32 temporaries of the elementwise chain).
    tile_bytes = 3 * th * tw * 4
    const_bytes = (2 * th * th + 2 * tw * tw) * 2 + 2 * 3 * th * tw * 4
    vmem_limit = int(min(48 * 1024 * 1024,
                         max(32 * 1024 * 1024,
                             8 * tile_bytes + 3 * const_bytes)))

    out = pl.pallas_call(
        _jpeg_kernel,
        out_shape=jax.ShapeDtypeStruct((B, 3, H, Wp), jnp.float32),
        grid=grid,
        in_specs=[
            pl.BlockSpec((1, 3, th, tw), lambda b, i, j: (b, 0, i, j)),
            # Constant operands: block index never changes, so they are DMA'd
            # into VMEM once and reused across the whole grid.
            pl.BlockSpec((th, th), lambda b, i, j: (0, 0)),
            pl.BlockSpec((th, th), lambda b, i, j: (0, 0)),
            pl.BlockSpec((tw, tw), lambda b, i, j: (0, 0)),
            pl.BlockSpec((tw, tw), lambda b, i, j: (0, 0)),
            pl.BlockSpec((3, th, tw), lambda b, i, j: (0, 0, 0)),
            pl.BlockSpec((3, th, tw), lambda b, i, j: (0, 0, 0)),
        ],
        out_specs=pl.BlockSpec((1, 3, th, tw), lambda b, i, j: (b, 0, i, j)),
        compiler_params=pltpu.CompilerParams(
            dimension_semantics=("parallel", "parallel", "parallel"),
            vmem_limit_bytes=vmem_limit),
    )(xf, lf, li, rf, ri, inv_q, q_tab)

    if pad_w:
        out = out[..., :W]
    return out.astype(x.dtype)


# ---------------------------------------------------------------------------
# Pure-jnp f32 reference (dense block-diagonal formulation) for a sanity check
# ---------------------------------------------------------------------------
def _jpeg_reference(x: jax.Array, quality: int) -> jax.Array:
    B, C, H, W = x.shape
    Dh = jnp.asarray(_block_diag_dct(H), dtype=jnp.float32)
    Dw = jnp.asarray(_block_diag_dct(W), dtype=jnp.float32)
    ql = _scaled_qtable(_LUMA_Q, quality)
    qc = _scaled_qtable(_CHROMA_Q, quality)
    qt = jnp.asarray(np.stack([np.tile(ql, (H // 8, W // 8)),
                               np.tile(qc, (H // 8, W // 8)),
                               np.tile(qc, (H // 8, W // 8))]).astype(np.float32))
    xc = jnp.clip(x.astype(jnp.float32), 0.0, 1.0) * 255.0
    r, g, b = xc[:, 0], xc[:, 1], xc[:, 2]
    y = _RGB2Y[0] * r + _RGB2Y[1] * g + _RGB2Y[2] * b - 128.0
    cb = _RGB2CB[0] * r + _RGB2CB[1] * g + _RGB2CB[2] * b
    cr = _RGB2CR[0] * r + _RGB2CR[1] * g + _RGB2CR[2] * b

    def codec(p, q):
        coef = jnp.einsum('ij,bjk,lk->bil', Dh, p, Dw)
        coef = jnp.round(coef / q) * q
        return jnp.einsum('ji,bjk,kl->bil', Dh, coef, Dw)

    y_r = codec(y, qt[0]) + 128.0
    cb_r = codec(cb, qt[1])
    cr_r = codec(cr, qt[2])
    rr = y_r + 1.402 * cr_r
    gg = y_r - 0.344136 * cb_r - 0.714136 * cr_r
    bb = y_r + 1.772 * cb_r
    out = jnp.stack([rr, gg, bb], axis=1)
    return jnp.clip(jnp.round(jnp.clip(out, 0.0, 255.0)) / 255.0, 0.0, 1.0)


if __name__ == "__main__":
    key = jax.random.PRNGKey(0)

    # Small batch of 3-channel images, consistent with the module's convention.
    x = jax.random.uniform(key, (2, 3, 16, 16), dtype=jnp.float32)
    out = jax.block_until_ready(jpeg_forward(x, quality=75))
    assert out.shape == x.shape
    assert float(out.min()) >= 0.0 and float(out.max()) <= 1.0
    ref = _jpeg_reference(x, 75)
    # bf16 MXU operands can flip an occasional quantizer rounding relative to
    # the exact-f32 reference; the tolerance stays well above that noise floor.
    mean_diff = float(jnp.mean(jnp.abs(out - ref)))
    assert mean_diff < 2.5e-2, f"mean |kernel - reference| too large: {mean_diff}"

    # Second tiny case that exercises the multi-band (tiled) grid path.
    x2 = jax.random.uniform(jax.random.PRNGKey(1), (1, 3, 32, 32),
                            dtype=jnp.float32)
    out2 = jax.block_until_ready(jpeg_forward(x2, quality=50))
    ref2 = _jpeg_reference(x2, 50)
    mean_diff2 = float(jnp.mean(jnp.abs(out2 - ref2)))
    assert out2.shape == x2.shape
    assert mean_diff2 < 2.5e-2, f"mean |kernel - reference| too large: {mean_diff2}"

    print("KERNEL_OK")
</pallas_src>

<mosaic_0001>
module attributes {stable_mosaic.version = 11 : i64} {
  func.func @_jpeg_kernel(%arg0: i32, %arg1: i32, %arg2: i32, %arg3: memref<1x3x16x16xf32, #tpu.memory_space<vmem>>, %arg4: memref<16x16xbf16, #tpu.memory_space<vmem>>, %arg5: memref<16x16xbf16, #tpu.memory_space<vmem>>, %arg6: memref<16x16xbf16, #tpu.memory_space<vmem>>, %arg7: memref<16x16xbf16, #tpu.memory_space<vmem>>, %arg8: memref<3x16x16xf32, #tpu.memory_space<vmem>>, %arg9: memref<3x16x16xf32, #tpu.memory_space<vmem>>, %arg10: memref<1x3x16x16xf32, #tpu.memory_space<vmem>>) attributes {dimension_semantics = [#tpu.dimension_semantics<parallel>, #tpu.dimension_semantics<parallel>, #tpu.dimension_semantics<parallel>], iteration_bounds = array<i64: 2, 1, 1>, scalar_prefetch = 0 : i64, scratch_operands = 0 : i64, tpu.core_type = #tpu.core_type<tc>, window_params = [{transform_indices = @transform_0, window_bounds = array<i64: 1, 3, 16, 16>}, {pipeline_mode = #tpu.pipeline_mode<synchronous>, transform_indices = @transform_1, window_bounds = array<i64: 16, 16>}, {pipeline_mode = #tpu.pipeline_mode<synchronous>, transform_indices = @transform_2, window_bounds = array<i64: 16, 16>}, {pipeline_mode = #tpu.pipeline_mode<synchronous>, transform_indices = @transform_3, window_bounds = array<i64: 16, 16>}, {pipeline_mode = #tpu.pipeline_mode<synchronous>, transform_indices = @transform_4, window_bounds = array<i64: 16, 16>}, {pipeline_mode = #tpu.pipeline_mode<synchronous>, transform_indices = @transform_5, window_bounds = array<i64: 3, 16, 16>}, {pipeline_mode = #tpu.pipeline_mode<synchronous>, transform_indices = @transform_6, window_bounds = array<i64: 3, 16, 16>}, {transform_indices = @transform_7, window_bounds = array<i64: 1, 3, 16, 16>}]} {
    %c0 = arith.constant 0 : index
    %c0_0 = arith.constant 0 : index
    %0 = vector.load %arg4[%c0, %c0_0] : memref<16x16xbf16, #tpu.memory_space<vmem>>, vector<16x16xbf16>
    %c0_1 = arith.constant 0 : index
    %c0_2 = arith.constant 0 : index
    %1 = vector.load %arg5[%c0_1, %c0_2] : memref<16x16xbf16, #tpu.memory_space<vmem>>, vector<16x16xbf16>
    %c0_3 = arith.constant 0 : index
    %c0_4 = arith.constant 0 : index
    %2 = vector.load %arg6[%c0_3, %c0_4] : memref<16x16xbf16, #tpu.memory_space<vmem>>, vector<16x16xbf16>
    %c0_5 = arith.constant 0 : index
    %c0_6 = arith.constant 0 : index
    %3 = vector.load %arg7[%c0_5, %c0_6] : memref<16x16xbf16, #tpu.memory_space<vmem>>, vector<16x16xbf16>
    %c0_7 = arith.constant 0 : index
    %c0_8 = arith.constant 0 : index
    %c0_9 = arith.constant 0 : index
    %c0_10 = arith.constant 0 : index
    %4 = vector.load %arg3[%c0_7, %c0_8, %c0_9, %c0_10] : memref<1x3x16x16xf32, #tpu.memory_space<vmem>>, vector<1x1x16x16xf32>
    %5 = vector.shape_cast %4 : vector<1x1x16x16xf32> to vector<16x16xf32>
    %cst = arith.constant 0.000000e+00 : f32
    %cst_11 = arith.constant 1.000000e+00 : f32
    %6 = vector.broadcast %cst : f32 to vector<16x16xf32>
    %7 = arith.maximumf %6, %5 : vector<16x16xf32>
    %8 = vector.broadcast %cst_11 : f32 to vector<16x16xf32>
    %9 = arith.minimumf %8, %7 : vector<16x16xf32>
    %c0_12 = arith.constant 0 : index
    %c1 = arith.constant 1 : index
    %c0_13 = arith.constant 0 : index
    %c0_14 = arith.constant 0 : index
    %10 = vector.load %arg3[%c0_12, %c1, %c0_13, %c0_14] : memref<1x3x16x16xf32, #tpu.memory_space<vmem>>, vector<1x1x16x16xf32>
    %11 = vector.shape_cast %10 : vector<1x1x16x16xf32> to vector<16x16xf32>
    %cst_15 = arith.constant 0.000000e+00 : f32
    %cst_16 = arith.constant 1.000000e+00 : f32
    %12 = vector.broadcast %cst_15 : f32 to vector<16x16xf32>
    %13 = arith.maximumf %12, %11 : vector<16x16xf32>
    %14 = vector.broadcast %cst_16 : f32 to vector<16x16xf32>
    %15 = arith.minimumf %14, %13 : vector<16x16xf32>
    %c0_17 = arith.constant 0 : index
    %c2 = arith.constant 2 : index
    %c0_18 = arith.constant 0 : index
    %c0_19 = arith.constant 0 : index
    %16 = vector.load %arg3[%c0_17, %c2, %c0_18, %c0_19] : memref<1x3x16x16xf32, #tpu.memory_space<vmem>>, vector<1x1x16x16xf32>
    %17 = vector.shape_cast %16 : vector<1x1x16x16xf32> to vector<16x16xf32>
    %cst_20 = arith.constant 0.000000e+00 : f32
    %cst_21 = arith.constant 1.000000e+00 : f32
    %18 = vector.broadcast %cst_20 : f32 to vector<16x16xf32>
    %19 = arith.maximumf %18, %17 : vector<16x16xf32>
    %20 = vector.broadcast %cst_21 : f32 to vector<16x16xf32>
    %21 = arith.minimumf %20, %19 : vector<16x16xf32>
    %cst_22 = arith.constant 7.624500e+01 : f32
    %22 = vector.broadcast %cst_22 : f32 to vector<16x16xf32>
    %23 = arith.mulf %22, %9 : vector<16x16xf32>
    %cst_23 = arith.constant 1.496850e+02 : f32
    %24 = vector.broadcast %cst_23 : f32 to vector<16x16xf32>
    %25 = arith.mulf %24, %15 : vector<16x16xf32>
    %26 = arith.addf %23, %25 : vector<16x16xf32>
    %cst_24 = arith.constant 2.907000e+01 : f32
    %27 = vector.broadcast %cst_24 : f32 to vector<16x16xf32>
    %28 = arith.mulf %27, %21 : vector<16x16xf32>
    %29 = arith.addf %26, %28 : vector<16x16xf32>
    %cst_25 = arith.constant 1.280000e+02 : f32
    %30 = vector.broadcast %cst_25 : f32 to vector<16x16xf32>
    %31 = arith.subf %29, %30 : vector<16x16xf32>
    %cst_26 = arith.constant -43.0276794 : f32
    %32 = vector.broadcast %cst_26 : f32 to vector<16x16xf32>
    %33 = arith.mulf %32, %9 : vector<16x16xf32>
    %cst_27 = arith.constant -84.4723205 : f32
    %34 = vector.broadcast %cst_27 : f32 to vector<16x16xf32>
    %35 = arith.mulf %34, %15 : vector<16x16xf32>
    %36 = arith.addf %33, %35 : vector<16x16xf32>
    %cst_28 = arith.constant 1.275000e+02 : f32
    %37 = vector.broadcast %cst_28 : f32 to vector<16x16xf32>
    %38 = arith.mulf %37, %21 : vector<16x16xf32>
    %39 = arith.addf %36, %38 : vector<16x16xf32>
    %cst_29 = arith.constant 1.275000e+02 : f32
    %40 = vector.broadcast %cst_29 : f32 to vector<16x16xf32>
    %41 = arith.mulf %40, %9 : vector<16x16xf32>
    %cst_30 = arith.constant -106.765442 : f32
    %42 = vector.broadcast %cst_30 : f32 to vector<16x16xf32>
    %43 = arith.mulf %42, %15 : vector<16x16xf32>
    %44 = arith.addf %41, %43 : vector<16x16xf32>
    %cst_31 = arith.constant -20.73456 : f32
    %45 = vector.broadcast %cst_31 : f32 to vector<16x16xf32>
    %46 = arith.mulf %45, %21 : vector<16x16xf32>
    %47 = arith.addf %44, %46 : vector<16x16xf32>
    %48 = arith.truncf %31 : vector<16x16xf32> to vector<16x16xbf16>
    %cst_32 = arith.constant dense<0.000000e+00> : vector<16x16xf32>
    %49 = tpu.matmul %0, %48, %cst_32 {dimension_numbers = #tpu.dot_dimension_numbers<[1], [0], [0], [1], [0, 0, 1, 1], [], []>} : vector<16x16xbf16>, vector<16x16xbf16>, vector<16x16xf32> -> vector<16x16xf32>
    %50 = arith.truncf %49 : vector<16x16xf32> to vector<16x16xbf16>
    %cst_33 = arith.constant dense<0.000000e+00> : vector<16x16xf32>
    %51 = tpu.matmul %50, %2, %cst_33 {dimension_numbers = #tpu.dot_dimension_numbers<[1], [0], [0], [1], [0, 0, 1, 1], [], []>} : vector<16x16xbf16>, vector<16x16xbf16>, vector<16x16xf32> -> vector<16x16xf32>
    %c0_34 = arith.constant 0 : index
    %c0_35 = arith.constant 0 : index
    %c0_36 = arith.constant 0 : index
    %52 = vector.load %arg8[%c0_34, %c0_35, %c0_36] : memref<3x16x16xf32, #tpu.memory_space<vmem>>, vector<1x16x16xf32>
    %53 = vector.shape_cast %52 : vector<1x16x16xf32> to vector<16x16xf32>
    %54 = arith.mulf %51, %53 : vector<16x16xf32>
    %55 = math.roundeven %54 : vector<16x16xf32>
    %c0_37 = arith.constant 0 : index
    %c0_38 = arith.constant 0 : index
    %c0_39 = arith.constant 0 : index
    %56 = vector.load %arg9[%c0_37, %c0_38, %c0_39] : memref<3x16x16xf32, #tpu.memory_space<vmem>>, vector<1x16x16xf32>
    %57 = vector.shape_cast %56 : vector<1x16x16xf32> to vector<16x16xf32>
    %58 = arith.mulf %55, %57 : vector<16x16xf32>
    %59 = arith.truncf %58 : vector<16x16xf32> to vector<16x16xbf16>
    %cst_40 = arith.constant dense<0.000000e+00> : vector<16x16xf32>
    %60 = tpu.matmul %1, %59, %cst_40 {dimension_numbers = #tpu.dot_dimension_numbers<[1], [0], [0], [1], [0, 0, 1, 1], [], []>} : vector<16x16xbf16>, vector<16x16xbf16>, vector<16x16xf32> -> vector<16x16xf32>
    %61 = arith.truncf %60 : vector<16x16xf32> to vector<16x16xbf16>
    %cst_41 = arith.constant dense<0.000000e+00> : vector<16x16xf32>
    %62 = tpu.matmul %61, %3, %cst_41 {dimension_numbers = #tpu.dot_dimension_numbers<[1], [0], [0], [1], [0, 0, 1, 1], [], []>} : vector<16x16xbf16>, vector<16x16xbf16>, vector<16x16xf32> -> vector<16x16xf32>
    %cst_42 = arith.constant 1.280000e+02 : f32
    %63 = vector.broadcast %cst_42 : f32 to vector<16x16xf32>
    %64 = arith.addf %62, %63 : vector<16x16xf32>
    %65 = arith.truncf %39 : vector<16x16xf32> to vector<16x16xbf16>
    %cst_43 = arith.constant dense<0.000000e+00> : vector<16x16xf32>
    %66 = tpu.matmul %0, %65, %cst_43 {dimension_numbers = #tpu.dot_dimension_numbers<[1], [0], [0], [1], [0, 0, 1, 1], [], []>} : vector<16x16xbf16>, vector<16x16xbf16>, vector<16x16xf32> -> vector<16x16xf32>
    %67 = arith.truncf %66 : vector<16x16xf32> to vector<16x16xbf16>
    %cst_44 = arith.constant dense<0.000000e+00> : vector<16x16xf32>
    %68 = tpu.matmul %67, %2, %cst_44 {dimension_numbers = #tpu.dot_dimension_numbers<[1], [0], [0], [1], [0, 0, 1, 1], [], []>} : vector<16x16xbf16>, vector<16x16xbf16>, vector<16x16xf32> -> vector<16x16xf32>
    %c1_45 = arith.constant 1 : index
    %c0_46 = arith.constant 0 : index
    %c0_47 = arith.constant 0 : index
    %69 = vector.load %arg8[%c1_45, %c0_46, %c0_47] : memref<3x16x16xf32, #tpu.memory_space<vmem>>, vector<1x16x16xf32>
    %70 = vector.shape_cast %69 : vector<1x16x16xf32> to vector<16x16xf32>
    %71 = arith.mulf %68, %70 : vector<16x16xf32>
    %72 = math.roundeven %71 : vector<16x16xf32>
    %c1_48 = arith.constant 1 : index
    %c0_49 = arith.constant 0 : index
    %c0_50 = arith.constant 0 : index
    %73 = vector.load %arg9[%c1_48, %c0_49, %c0_50] : memref<3x16x16xf32, #tpu.memory_space<vmem>>, vector<1x16x16xf32>
    %74 = vector.shape_cast %73 : vector<1x16x16xf32> to vector<16x16xf32>
    %75 = arith.mulf %72, %74 : vector<16x16xf32>
    %76 = arith.truncf %75 : vector<16x16xf32> to vector<16x16xbf16>
    %cst_51 = arith.constant dense<0.000000e+00> : vector<16x16xf32>
    %77 = tpu.matmul %1, %76, %cst_51 {dimension_numbers = #tpu.dot_dimension_numbers<[1], [0], [0], [1], [0, 0, 1, 1], [], []>} : vector<16x16xbf16>, vector<16x16xbf16>, vector<16x16xf32> -> vector<16x16xf32>
    %78 = arith.truncf %77 : vector<16x16xf32> to vector<16x16xbf16>
    %cst_52 = arith.constant dense<0.000000e+00> : vector<16x16xf32>
    %79 = tpu.matmul %78, %3, %cst_52 {dimension_numbers = #tpu.dot_dimension_numbers<[1], [0], [0], [1], [0, 0, 1, 1], [], []>} : vector<16x16xbf16>, vector<16x16xbf16>, vector<16x16xf32> -> vector<16x16xf32>
    %80 = arith.truncf %47 : vector<16x16xf32> to vector<16x16xbf16>
    %cst_53 = arith.constant dense<0.000000e+00> : vector<16x16xf32>
    %81 = tpu.matmul %0, %80, %cst_53 {dimension_numbers = #tpu.dot_dimension_numbers<[1], [0], [0], [1], [0, 0, 1, 1], [], []>} : vector<16x16xbf16>, vector<16x16xbf16>, vector<16x16xf32> -> vector<16x16xf32>
    %82 = arith.truncf %81 : vector<16x16xf32> to vector<16x16xbf16>
    %cst_54 = arith.constant dense<0.000000e+00> : vector<16x16xf32>
    %83 = tpu.matmul %82, %2, %cst_54 {dimension_numbers = #tpu.dot_dimension_numbers<[1], [0], [0], [1], [0, 0, 1, 1], [], []>} : vector<16x16xbf16>, vector<16x16xbf16>, vector<16x16xf32> -> vector<16x16xf32>
    %c2_55 = arith.constant 2 : index
    %c0_56 = arith.constant 0 : index
    %c0_57 = arith.constant 0 : index
    %84 = vector.load %arg8[%c2_55, %c0_56, %c0_57] : memref<3x16x16xf32, #tpu.memory_space<vmem>>, vector<1x16x16xf32>
    %85 = vector.shape_cast %84 : vector<1x16x16xf32> to vector<16x16xf32>
    %86 = arith.mulf %83, %85 : vector<16x16xf32>
    %87 = math.roundeven %86 : vector<16x16xf32>
    %c2_58 = arith.constant 2 : index
    %c0_59 = arith.constant 0 : index
    %c0_60 = arith.constant 0 : index
    %88 = vector.load %arg9[%c2_58, %c0_59, %c0_60] : memref<3x16x16xf32, #tpu.memory_space<vmem>>, vector<1x16x16xf32>
    %89 = vector.shape_cast %88 : vector<1x16x16xf32> to vector<16x16xf32>
    %90 = arith.mulf %87, %89 : vector<16x16xf32>
    %91 = arith.truncf %90 : vector<16x16xf32> to vector<16x16xbf16>
    %cst_61 = arith.constant dense<0.000000e+00> : vector<16x16xf32>
    %92 = tpu.matmul %1, %91, %cst_61 {dimension_numbers = #tpu.dot_dimension_numbers<[1], [0], [0], [1], [0, 0, 1, 1], [], []>} : vector<16x16xbf16>, vector<16x16xbf16>, vector<16x16xf32> -> vector<16x16xf32>
    %93 = arith.truncf %92 : vector<16x16xf32> to vector<16x16xbf16>
    %cst_62 = arith.constant dense<0.000000e+00> : vector<16x16xf32>
    %94 = tpu.matmul %93, %3, %cst_62 {dimension_numbers = #tpu.dot_dimension_numbers<[1], [0], [0], [1], [0, 0, 1, 1], [], []>} : vector<16x16xbf16>, vector<16x16xbf16>, vector<16x16xf32> -> vector<16x16xf32>
    %cst_63 = arith.constant 1.402000e+00 : f32
    %95 = vector.broadcast %cst_63 : f32 to vector<16x16xf32>
    %96 = arith.mulf %95, %94 : vector<16x16xf32>
    %97 = arith.addf %64, %96 : vector<16x16xf32>
    %cst_64 = arith.constant 3.441360e-01 : f32
    %98 = vector.broadcast %cst_64 : f32 to vector<16x16xf32>
    %99 = arith.mulf %98, %79 : vector<16x16xf32>
    %100 = arith.subf %64, %99 : vector<16x16xf32>
    %cst_65 = arith.constant 7.141360e-01 : f32
    %101 = vector.broadcast %cst_65 : f32 to vector<16x16xf32>
    %102 = arith.mulf %101, %94 : vector<16x16xf32>
    %103 = arith.subf %100, %102 : vector<16x16xf32>
    %cst_66 = arith.constant 1.772000e+00 : f32
    %104 = vector.broadcast %cst_66 : f32 to vector<16x16xf32>
    %105 = arith.mulf %104, %79 : vector<16x16xf32>
    %106 = arith.addf %64, %105 : vector<16x16xf32>
    %cst_67 = arith.constant 0.000000e+00 : f32
    %cst_68 = arith.constant 2.550000e+02 : f32
    %107 = vector.broadcast %cst_67 : f32 to vector<16x16xf32>
    %108 = arith.maximumf %107, %97 : vector<16x16xf32>
    %109 = vector.broadcast %cst_68 : f32 to vector<16x16xf32>
    %110 = arith.minimumf %109, %108 : vector<16x16xf32>
    %111 = math.roundeven %110 : vector<16x16xf32>
    %cst_69 = arith.constant 0.00392156886 : f32
    %112 = vector.broadcast %cst_69 : f32 to vector<16x16xf32>
    %113 = arith.mulf %111, %112 : vector<16x16xf32>
    %c0_70 = arith.constant 0 : index
    %c0_71 = arith.constant 0 : index
    %c0_72 = arith.constant 0 : index
    %c0_73 = arith.constant 0 : index
    %114 = vector.load %arg10[%c0_70, %c0_71, %c0_72, %c0_73] : memref<1x3x16x16xf32, #tpu.memory_space<vmem>>, vector<1x1x16x16xf32>
    %115 = vector.shape_cast %114 : vector<1x1x16x16xf32> to vector<16x16xf32>
    %116 = vector.shape_cast %113 : vector<16x16xf32> to vector<1x1x16x16xf32>
    tpu.vector_store %arg10[%c0_70, %c0_71, %c0_72, %c0_73], %116 {strides = array<i32>} : memref<1x3x16x16xf32, #tpu.memory_space<vmem>>, vector<1x1x16x16xf32>,
    %cst_74 = arith.constant 0.000000e+00 : f32
    %cst_75 = arith.constant 2.550000e+02 : f32
    %117 = vector.broadcast %cst_74 : f32 to vector<16x16xf32>
    %118 = arith.maximumf %117, %103 : vector<16x16xf32>
    %119 = vector.broadcast %cst_75 : f32 to vector<16x16xf32>
    %120 = arith.minimumf %119, %118 : vector<16x16xf32>
    %121 = math.roundeven %120 : vector<16x16xf32>
    %cst_76 = arith.constant 0.00392156886 : f32
    %122 = vector.broadcast %cst_76 : f32 to vector<16x16xf32>
    %123 = arith.mulf %121, %122 : vector<16x16xf32>
    %c0_77 = arith.constant 0 : index
    %c1_78 = arith.constant 1 : index
    %c0_79 = arith.constant 0 : index
    %c0_80 = arith.constant 0 : index
    %124 = vector.load %arg10[%c0_77, %c1_78, %c0_79, %c0_80] : memref<1x3x16x16xf32, #tpu.memory_space<vmem>>, vector<1x1x16x16xf32>
    %125 = vector.shape_cast %124 : vector<1x1x16x16xf32> to vector<16x16xf32>
    %126 = vector.shape_cast %123 : vector<16x16xf32> to vector<1x1x16x16xf32>
    tpu.vector_store %arg10[%c0_77, %c1_78, %c0_79, %c0_80], %126 {strides = array<i32>} : memref<1x3x16x16xf32, #tpu.memory_space<vmem>>, vector<1x1x16x16xf32>,
    %cst_81 = arith.constant 0.000000e+00 : f32
    %cst_82 = arith.constant 2.550000e+02 : f32
    %127 = vector.broadcast %cst_81 : f32 to vector<16x16xf32>
    %128 = arith.maximumf %127, %106 : vector<16x16xf32>
    %129 = vector.broadcast %cst_82 : f32 to vector<16x16xf32>
    %130 = arith.minimumf %129, %128 : vector<16x16xf32>
    %131 = math.roundeven %130 : vector<16x16xf32>
    %cst_83 = arith.constant 0.00392156886 : f32
    %132 = vector.broadcast %cst_83 : f32 to vector<16x16xf32>
    %133 = arith.mulf %131, %132 : vector<16x16xf32>
    %c0_84 = arith.constant 0 : index
    %c2_85 = arith.constant 2 : index
    %c0_86 = arith.constant 0 : index
    %c0_87 = arith.constant 0 : index
    %134 = vector.load %arg10[%c0_84, %c2_85, %c0_86, %c0_87] : memref<1x3x16x16xf32, #tpu.memory_space<vmem>>, vector<1x1x16x16xf32>
    %135 = vector.shape_cast %134 : vector<1x1x16x16xf32> to vector<16x16xf32>
    %136 = vector.shape_cast %133 : vector<16x16xf32> to vector<1x1x16x16xf32>
    tpu.vector_store %arg10[%c0_84, %c2_85, %c0_86, %c0_87], %136 {strides = array<i32>} : memref<1x3x16x16xf32, #tpu.memory_space<vmem>>, vector<1x1x16x16xf32>,
    return
  }
  func.func @transform_0(%arg0: i32, %arg1: i32, %arg2: i32) -> (i32, i32, i32, i32) {
    %c0_i32 = arith.constant 0 : i32
    %c0_i32_0 = arith.constant 0 : i32
    return %arg0, %c0_i32, %arg1, %arg2 : i32, i32, i32, i32
  }
  func.func @transform_1(%arg0: i32, %arg1: i32, %arg2: i32) -> (i32, i32) {
    %c0_i32 = arith.constant 0 : i32
    %c0_i32_0 = arith.constant 0 : i32
    %c0_i32_1 = arith.constant 0 : i32
    return %c0_i32, %c0_i32_0 : i32, i32
  }
  func.func @transform_2(%arg0: i32, %arg1: i32, %arg2: i32) -> (i32, i32) {
    %c0_i32 = arith.constant 0 : i32
    %c0_i32_0 = arith.constant 0 : i32
    %c0_i32_1 = arith.constant 0 : i32
    return %c0_i32, %c0_i32_0 : i32, i32
  }
  func.func @transform_3(%arg0: i32, %arg1: i32, %arg2: i32) -> (i32, i32) {
    %c0_i32 = arith.constant 0 : i32
    %c0_i32_0 = arith.constant 0 : i32
    %c0_i32_1 = arith.constant 0 : i32
    return %c0_i32, %c0_i32_0 : i32, i32
  }
  func.func @transform_4(%arg0: i32, %arg1: i32, %arg2: i32) -> (i32, i32) {
    %c0_i32 = arith.constant 0 : i32
    %c0_i32_0 = arith.constant 0 : i32
    %c0_i32_1 = arith.constant 0 : i32
    return %c0_i32, %c0_i32_0 : i32, i32
  }
  func.func @transform_5(%arg0: i32, %arg1: i32, %arg2: i32) -> (i32, i32, i32) {
    %c0_i32 = arith.constant 0 : i32
    %c0_i32_0 = arith.constant 0 : i32
    %c0_i32_1 = arith.constant 0 : i32
    %c0_i32_2 = arith.constant 0 : i32
    return %c0_i32, %c0_i32_0, %c0_i32_1 : i32, i32, i32
  }
  func.func @transform_6(%arg0: i32, %arg1: i32, %arg2: i32) -> (i32, i32, i32) {
    %c0_i32 = arith.constant 0 : i32
    %c0_i32_0 = arith.constant 0 : i32
    %c0_i32_1 = arith.constant 0 : i32
    %c0_i32_2 = arith.constant 0 : i32
    return %c0_i32, %c0_i32_0, %c0_i32_1 : i32, i32, i32
  }
  func.func @transform_7(%arg0: i32, %arg1: i32, %arg2: i32) -> (i32, i32, i32, i32) {
    %c0_i32 = arith.constant 0 : i32
    %c0_i32_0 = arith.constant 0 : i32
    return %arg0, %c0_i32, %arg1, %arg2 : i32, i32, i32, i32
  }
}

</mosaic_0001>

<llo_original>
// kernel: jpeg_forward.1
$region0: #{jpeg_forward.1}
  #allocation0 [shape = 'u32[]', space=smem, size = 0x4, offset = 0x4, fixed_abs, tag = 'smem constant byte address 0x4 - core index']
  #allocation1 [shape = 'u32[72,128]{1,0:T(1,128)}', space=vmem, size = 0x9000, scoped, tag = 'internal scratch']
  %s0 = inlined_call_operand.hbm [shape: f32[2,3,16,16], index: 0, kind: input, shape index: {}]
  %s1 = inlined_call_operand.hbm [shape: bf16[16,16], index: 1, kind: input, shape index: {}, may-alias: {1,4}]
  %s2 = inlined_call_operand.hbm [shape: bf16[16,16], index: 2, kind: input, shape index: {}, may-alias: {2,3}]
  %s3 = inlined_call_operand.hbm [shape: bf16[16,16], index: 3, kind: input, shape index: {}, may-alias: {2,3}]
  %s4 = inlined_call_operand.hbm [shape: bf16[16,16], index: 4, kind: input, shape index: {}, may-alias: {1,4}]
  %s5 = inlined_call_operand.hbm [shape: f32[3,16,16], index: 5, kind: input, shape index: {}]
  %s6 = inlined_call_operand.hbm [shape: f32[3,16,16], index: 6, kind: input, shape index: {}]
  %s7 = inlined_call_operand.hbm [shape: f32[2,3,16,16], index: 7, kind: output, shape index: {}]
  %s8 = sld [smem:[#allocation0]]
  $region89: #{jpeg_forward.1} parent=0
    _
  %s10 = ssub.s32 1, %s8
  %s11 = scalar_select 0, %s10, %s8
  $region1: #{jpeg_forward.1} parent=0
    #allocation2 [shape = 'u8[49152]{0}', space=vmem, size = 0xc000, scoped, tag = 'input window, operand 0']
    #allocation3 [shape = 's32[2]{0}', space=sflag, size = 0x8, scoped, tag = 'scoped memory for jpeg_forward.1']
    #allocation4 [shape = 's32[2]{0}', space=sflag, size = 0x8, scoped, tag = 'scoped memory for jpeg_forward.1']
    #allocation5 [shape = 'u8[4096]{0}', space=vmem, size = 0x1000, scoped, tag = 'input window, operand 1, single buffered']
    #allocation6 [shape = 's32[1]{0}', space=sflag, size = 0x4, scoped, tag = 'scoped memory for jpeg_forward.1']
    #allocation7 [shape = 'u8[4096]{0}', space=vmem, size = 0x1000, scoped, tag = 'input window, operand 2, single buffered']
    #allocation8 [shape = 'u8[4096]{0}', space=vmem, size = 0x1000, scoped, tag = 'input window, operand 3, single buffered']
    #allocation9 [shape = 's32[1]{0}', space=sflag, size = 0x4, scoped, tag = 'scoped memory for jpeg_forward.1']
    #allocation10 [shape = 'u8[4096]{0}', space=vmem, size = 0x1000, scoped, tag = 'input window, operand 4, single buffered']
    #allocation11 [shape = 'u8[24576]{0}', space=vmem, size = 0x6000, scoped, tag = 'input window, operand 5, single buffered']
    #allocation12 [shape = 's32[1]{0}', space=sflag, size = 0x4, scoped, tag = 'scoped memory for jpeg_forward.1']
    #allocation13 [shape = 'u8[24576]{0}', space=vmem, size = 0x6000, scoped, tag = 'input window, operand 6, single buffered']
    #allocation14 [shape = 'u8[49152]{0}', space=vmem, size = 0xc000, scoped, tag = 'output window, operand 0']
    %12 = vsyncpa [#allocation3], 0
    %s13 = scalar_lea.sflag [#allocation3], 1
    %14 = vsyncpa %s13, 0
    %15 = vsyncpa [#allocation6], 0
    %16 = vsyncpa [#allocation9], 0
    %17 = vsyncpa [#allocation12], 0
    %18 = vsyncpa [#allocation4], 0
    %s19 = scalar_lea.sflag [#allocation4], 1
    %20 = vsyncpa %s19, 0
    loop: start=0, step=1, limit=4
    $region2: #{jpeg_forward.1} parent=1 // loop_pre_header
      _
    $region3: #{jpeg_forward.1} parent=1 // loop_header
      %s22 = sphi 0, %s26
      %p23 = scmp.ge.s32.totalorder %s22, 4
      %s29 = sphi 0, %s48
      %s30 = sphi 0, %s44
      %s31 = sphi 0, %s40
      %s32 = sphi 0, %s29
      %s33 = sphi 0, %s30
      %s34 = sphi 0, %s31
      %s35 = sphi 0, %s32
      %s36 = sphi 0, %s33
      %s37 = sphi 0, %s34
      %s55 = sphi 0, %s57
      %s58 = sphi 0, %s55
      %s59 = sphi 0, %s58
      %s75 = sphi 0, %s59
      %s79 = sphi 0, %s79
      %s81 = sphi 0, %s79
      %s82 = sphi 0, %s81
      %s96 = sphi 0, %s82
      %s100 = sphi 0, %s100
      %s102 = sphi 0, %s100
      %s103 = sphi 0, %s102
      %s117 = sphi 0, %s103
      %s121 = sphi 0, %s121
      %s123 = sphi 0, %s121
      %s124 = sphi 0, %s123
      %s138 = sphi 0, %s124
      %s142 = sphi 0, %s142
      %s144 = sphi 0, %s142
      %s145 = sphi 0, %s144
      %s159 = sphi 0, %s145
      %s163 = sphi 0, %s163
      %s165 = sphi 0, %s163
      %s166 = sphi 0, %s165
      %s180 = sphi 0, %s166
      %s184 = sphi 0, %s184
      %s186 = sphi 0, %s184
      %s187 = sphi 0, %s186
      %s201 = sphi 0, %s187
      %s211 = sphi 0, %s213
      %s214 = sphi 0, %s211
      %s215 = sphi 0, %s214
      %s231 = sphi 0, %s215
    $region4: #{jpeg_forward.1} parent=1 // loop_header_branch
      %25 = sbr.rel (%p23) target = $region8
    $region5: #{jpeg_forward.1} parent=1 // loop_body
      %s27 = ssub.s32 %s22, 1
      %s28 = ssub.s32 %s22, 2
      %s38 = sadd.s32 1, %s31
      %p39 = scmp.ge.s32.totalorder %s38, 1
      %s40 = scalar_select %p39, 0, %s38
      %s41 = sadd.s32 1, %s30
      %s42 = scalar_select %p39, %s41, %s30
      %p43 = scmp.ge.s32.totalorder %s42, 1
      %s44 = scalar_select %p43, 0, %s42
      %s45 = sadd.s32 1, %s29
      %s46 = scalar_select %p43, %s45, %s29
      %p47 = scmp.ge.s32.totalorder %s46, 2
      %s48 = scalar_select %p47, 0, %s46
      %s49 = ssub.s32 %s29, %s48
      %s50 = ssub.s32 %s30, %s44
      %s51 = sor.u32 %s49, %s50
      %s52 = ssub.s32 %s31, %s40
      %s53 = sor.u32 %s51, %s52
      %p54 = scmp.eq.s32.totalorder %s53, 0
      %s56 = sadd.s32 %s55, 1
      %s57 = scalar_select %p54, %s55, %s56
      %p60 = pneg %p54
      %p61 = scmp.eq.s32.totalorder %s22, 1
      %p62 = por %p60, %p61
      %p63 = scmp.ne.s32.totalorder %s55, %s58
      %p64 = scmp.eq.s32.totalorder %s22, 0
      %p65 = por %p63, %p64
      %p66 = scmp.ne.s32.totalorder %s55, %s58
      %p67 = scmp.eq.s32.totalorder %s27, 1
      %p68 = por %p66, %p67
      %p69 = scmp.ne.s32.totalorder %s58, %s59
      %p70 = scmp.eq.s32.totalorder %s27, 0
      %p71 = por %p69, %p70
      %p72 = scmp.ne.s32.totalorder %s58, %s59
      %p73 = scmp.eq.s32.totalorder %s28, 1
      %p74 = por %p72, %p73
      %p76 = scmp.ne.s32.totalorder %s59, %s75
      %p77 = scmp.eq.s32.totalorder %s28, 0
      %p78 = por %p76, %p77
      %s80 = sadd.s32 %s79, 1
      %p83 = scmp.eq.s32.totalorder %s22, 1
      %p84 = scmp.ne.s32.totalorder %s79, %s81
      %p85 = scmp.eq.s32.totalorder %s22, 0
      %p86 = por %p84, %p85
      %p87 = scmp.ne.s32.totalorder %s79, %s81
      %p88 = scmp.eq.s32.totalorder %s27, 1
      %p89 = por %p87, %p88
      %p90 = scmp.ne.s32.totalorder %s81, %s82
      %p91 = scmp.eq.s32.totalorder %s27, 0
      %p92 = por %p90, %p91
      %p93 = scmp.ne.s32.totalorder %s81, %s82
      %p94 = scmp.eq.s32.totalorder %s28, 1
      %p95 = por %p93, %p94
      %p97 = scmp.ne.s32.totalorder %s82, %s96
      %p98 = scmp.eq.s32.totalorder %s28, 0
      %p99 = por %p97, %p98
      %s101 = sadd.s32 %s100, 1
      %p104 = scmp.eq.s32.totalorder %s22, 1
      %p105 = scmp.ne.s32.totalorder %s100, %s102
      %p106 = scmp.eq.s32.totalorder %s22, 0
      %p107 = por %p105, %p106
      %p108 = scmp.ne.s32.totalorder %s100, %s102
      %p109 = scmp.eq.s32.totalorder %s27, 1
      %p110 = por %p108, %p109
      %p111 = scmp.ne.s32.totalorder %s102, %s103
      %p112 = scmp.eq.s32.totalorder %s27, 0
      %p113 = por %p111, %p112
      %p114 = scmp.ne.s32.totalorder %s102, %s103
      %p115 = scmp.eq.s32.totalorder %s28, 1
      %p116 = por %p114, %p115
      %p118 = scmp.ne.s32.totalorder %s103, %s117
      %p119 = scmp.eq.s32.totalorder %s28, 0
      %p120 = por %p118, %p119
      %s122 = sadd.s32 %s121, 1
      %p125 = scmp.eq.s32.totalorder %s22, 1
      %p126 = scmp.ne.s32.totalorder %s121, %s123
      %p127 = scmp.eq.s32.totalorder %s22, 0
      %p128 = por %p126, %p127
      %p129 = scmp.ne.s32.totalorder %s121, %s123
      %p130 = scmp.eq.s32.totalorder %s27, 1
      %p131 = por %p129, %p130
      %p132 = scmp.ne.s32.totalorder %s123, %s124
      %p133 = scmp.eq.s32.totalorder %s27, 0
      %p134 = por %p132, %p133
      %p135 = scmp.ne.s32.totalorder %s123, %s124
      %p136 = scmp.eq.s32.totalorder %s28, 1
      %p137 = por %p135, %p136
      %p139 = scmp.ne.s32.totalorder %s124, %s138
      %p140 = scmp.eq.s32.totalorder %s28, 0
      %p141 = por %p139, %p140
      %s143 = sadd.s32 %s142, 1
      %p146 = scmp.eq.s32.totalorder %s22, 1
      %p147 = scmp.ne.s32.totalorder %s142, %s144
      %p148 = scmp.eq.s32.totalorder %s22, 0
      %p149 = por %p147, %p148
      %p150 = scmp.ne.s32.totalorder %s142, %s144
      %p151 = scmp.eq.s32.totalorder %s27, 1
      %p152 = por %p150, %p151
      %p153 = scmp.ne.s32.totalorder %s144, %s145
      %p154 = scmp.eq.s32.totalorder %s27, 0
      %p155 = por %p153, %p154
      %p156 = scmp.ne.s32.totalorder %s144, %s145
      %p157 = scmp.eq.s32.totalorder %s28, 1
      %p158 = por %p156, %p157
      %p160 = scmp.ne.s32.totalorder %s145, %s159
      %p161 = scmp.eq.s32.totalorder %s28, 0
      %p162 = por %p160, %p161
      %s164 = sadd.s32 %s163, 1
      %p167 = scmp.eq.s32.totalorder %s22, 1
      %p168 = scmp.ne.s32.totalorder %s163, %s165
      %p169 = scmp.eq.s32.totalorder %s22, 0
      %p170 = por %p168, %p169
      %p171 = scmp.ne.s32.totalorder %s163, %s165
      %p172 = scmp.eq.s32.totalorder %s27, 1
      %p173 = por %p171, %p172
      %p174 = scmp.ne.s32.totalorder %s165, %s166
      %p175 = scmp.eq.s32.totalorder %s27, 0
      %p176 = por %p174, %p175
      %p177 = scmp.ne.s32.totalorder %s165, %s166
      %p178 = scmp.eq.s32.totalorder %s28, 1
      %p179 = por %p177, %p178
      %p181 = scmp.ne.s32.totalorder %s166, %s180
      %p182 = scmp.eq.s32.totalorder %s28, 0
      %p183 = por %p181, %p182
      %s185 = sadd.s32 %s184, 1
      %p188 = scmp.eq.s32.totalorder %s22, 1
      %p189 = scmp.ne.s32.totalorder %s184, %s186
      %p190 = scmp.eq.s32.totalorder %s22, 0
      %p191 = por %p189, %p190
      %p192 = scmp.ne.s32.totalorder %s184, %s186
      %p193 = scmp.eq.s32.totalorder %s27, 1
      %p194 = por %p192, %p193
      %p195 = scmp.ne.s32.totalorder %s186, %s187
      %p196 = scmp.eq.s32.totalorder %s27, 0
      %p197 = por %p195, %p196
      %p198 = scmp.ne.s32.totalorder %s186, %s187
      %p199 = scmp.eq.s32.totalorder %s28, 1
      %p200 = por %p198, %p199
      %p202 = scmp.ne.s32.totalorder %s187, %s201
      %p203 = scmp.eq.s32.totalorder %s28, 0
      %p204 = por %p202, %p203
      %s205 = ssub.s32 %s29, %s48
      %s206 = ssub.s32 %s30, %s44
      %s207 = sor.u32 %s205, %s206
      %s208 = ssub.s32 %s31, %s40
      %s209 = sor.u32 %s207, %s208
      %p210 = scmp.eq.s32.totalorder %s209, 0
      %s212 = sadd.s32 %s211, 1
      %s213 = scalar_select %p210, %s211, %s212
      %p216 = pneg %p210
      %p217 = scmp.eq.s32.totalorder %s22, 1
      %p218 = por %p216, %p217
      %p219 = scmp.ne.s32.totalorder %s211, %s214
      %p220 = scmp.eq.s32.totalorder %s22, 0
      %p221 = por %p219, %p220
      %p222 = scmp.ne.s32.totalorder %s211, %s214
      %p223 = scmp.eq.s32.totalorder %s27, 1
      %p224 = por %p222, %p223
      %p225 = scmp.ne.s32.totalorder %s214, %s215
      %p226 = scmp.eq.s32.totalorder %s27, 0
      %p227 = por %p225, %p226
      %p228 = scmp.ne.s32.totalorder %s214, %s215
      %p229 = scmp.eq.s32.totalorder %s28, 1
      %p230 = por %p228, %p229
      %p232 = scmp.ne.s32.totalorder %s215, %s231
      %p233 = scmp.eq.s32.totalorder %s28, 0
      %p234 = por %p232, %p233
      %p235 = scmp.le.s32.totalorder 1, %s22
      %p236 = scmp.lt.s32.totalorder %s22, 3
      %p237 = pnand %p235, %p236
      %p238 = pneg %p237
      // Predicated region
      $region9: #{jpeg_forward.1} parent=5 // pred_check
        _
      $region10: #{jpeg_forward.1} parent=5 // pred_check_branch
        %240 = sbr.rel (%p237) target = $region12
      $region11: #{jpeg_forward.1} parent=5 // pred_region
        %s241 = ssub.s32 %s22, 1
        // Predicated region
        $region13: #{jpeg_forward.1} parent=11 // pred_check
          %p242 = pneg %p92
        $region14: #{jpeg_forward.1} parent=11 // pred_check_branch
          %244 = sbr.rel (%p242) target = $region16
        $region15: #{jpeg_forward.1} parent=11 // pred_region
          %246 = vsyncadd [#allocation6], 0
          %s247 = sshll.u32 %s1, 4
          %s248 = int_to_ptr.hbm [resolvable:$true] %s247
          %s249 = sshll.u32 [#allocation5], 4
          %s250 = int_to_ptr.vmem [resolvable:$true] %s249
          %255 = dma.hbm_to_vmem [thread:$0]  %s248, 128, %s250, [#allocation6], 64, 64, 4
        $region16: #{jpeg_forward.1} parent=11 // pred_fallthru
          _
        // Predicated region
        $region17: #{jpeg_forward.1} parent=11 // pred_check
          %p256 = pneg %p113
        $region18: #{jpeg_forward.1} parent=11 // pred_check_branch
          %258 = sbr.rel (%p256) target = $region20
        $region19: #{jpeg_forward.1} parent=11 // pred_region
          %260 = vsyncadd [#allocation6], 0
          %s261 = sshll.u32 %s2, 4
          %s262 = int_to_ptr.hbm [resolvable:$true] %s261
          %s263 = sshll.u32 [#allocation7], 4
          %s264 = int_to_ptr.vmem [resolvable:$true] %s263
          %269 = dma.hbm_to_vmem [thread:$0]  %s262, 128, %s264, [#allocation6], 64, 64, 4
        $region20: #{jpeg_forward.1} parent=11 // pred_fallthru
          _
        // Predicated region
        $region21: #{jpeg_forward.1} parent=11 // pred_check
          %p270 = pneg %p134
        $region22: #{jpeg_forward.1} parent=11 // pred_check_branch
          %272 = sbr.rel (%p270) target = $region24
        $region23: #{jpeg_forward.1} parent=11 // pred_region
          %274 = vsyncadd [#allocation9], 0
          %s275 = sshll.u32 %s3, 4
          %s276 = int_to_ptr.hbm [resolvable:$true] %s275
          %s277 = sshll.u32 [#allocation8], 4
          %s278 = int_to_ptr.vmem [resolvable:$true] %s277
          %283 = dma.hbm_to_vmem [thread:$0]  %s276, 128, %s278, [#allocation9], 64, 64, 4
        $region24: #{jpeg_forward.1} parent=11 // pred_fallthru
          _
        // Predicated region
        $region25: #{jpeg_forward.1} parent=11 // pred_check
          %p284 = pneg %p155
        $region26: #{jpeg_forward.1} parent=11 // pred_check_branch
          %286 = sbr.rel (%p284) target = $region28
        $region27: #{jpeg_forward.1} parent=11 // pred_region
          %288 = vsyncadd [#allocation9], 0
          %s289 = sshll.u32 %s4, 4
          %s290 = int_to_ptr.hbm [resolvable:$true] %s289
          %s291 = sshll.u32 [#allocation10], 4
          %s292 = int_to_ptr.vmem [resolvable:$true] %s291
          %297 = dma.hbm_to_vmem [thread:$0]  %s290, 128, %s292, [#allocation9], 64, 64, 4
        $region28: #{jpeg_forward.1} parent=11 // pred_fallthru
          _
        // Predicated region
        $region29: #{jpeg_forward.1} parent=11 // pred_check
          %p298 = pneg %p176
        $region30: #{jpeg_forward.1} parent=11 // pred_check_branch
          %300 = sbr.rel (%p298) target = $region32
        $region31: #{jpeg_forward.1} parent=11 // pred_region
          %302 = vsyncadd [#allocation12], 0
          %s303 = sshll.u32 %s5, 4
          %s304 = int_to_ptr.hbm [resolvable:$true] %s303
          %s305 = sshll.u32 [#allocation11], 4
          %s306 = int_to_ptr.vmem [resolvable:$true] %s305
          %311 = dma.hbm_to_vmem [thread:$0]  %s304, 768, %s306, [#allocation12], 128, 128, 8
        $region32: #{jpeg_forward.1} parent=11 // pred_fallthru
          _
        // Predicated region
        $region33: #{jpeg_forward.1} parent=11 // pred_check
          %p312 = pneg %p197
        $region34: #{jpeg_forward.1} parent=11 // pred_check_branch
          %314 = sbr.rel (%p312) target = $region36
        $region35: #{jpeg_forward.1} parent=11 // pred_region
          %316 = vsyncadd [#allocation12], 0
          %s317 = sshll.u32 %s6, 4
          %s318 = int_to_ptr.hbm [resolvable:$true] %s317
          %s319 = sshll.u32 [#allocation13], 4
          %s320 = int_to_ptr.vmem [resolvable:$true] %s319
          %325 = dma.hbm_to_vmem [thread:$0]  %s318, 768, %s320, [#allocation12], 128, 128, 8
        $region36: #{jpeg_forward.1} parent=11 // pred_fallthru
          _
      $region12: #{jpeg_forward.1} parent=5 // pred_fallthru
        _
      %p326 = scmp.lt.s32.totalorder %s22, 2
      // Predicated region
      $region37: #{jpeg_forward.1} parent=5 // pred_check
        %p327 = pneg %p326
      $region38: #{jpeg_forward.1} parent=5 // pred_check_branch
        %329 = sbr.rel (%p327) target = $region40
      $region39: #{jpeg_forward.1} parent=5 // pred_region
        // Predicated region
        $region41: #{jpeg_forward.1} parent=39 // pred_check
          %p330 = pneg %p65
        $region42: #{jpeg_forward.1} parent=39 // pred_check_branch
          %332 = sbr.rel (%p330) target = $region44
        $region43: #{jpeg_forward.1} parent=39 // pred_region
          %s333 = sand.u32 %s55, 1
          %s334 = scalar_lea.sflag [#allocation3], %s333
          %s335 = sand.u32 %s55, 1
          %s336 = smul.addr %s335, 48
          %s337 = scalar_lea.vmem [#allocation2], %s336
          %s338 = smul.u32 2, %s30
          %340 = vsyncadd %s334, 0
          %s341 = sadd.s32 %s31, %s338
          %s342 = smul.addr %s29, 6
          %s343 = sadd.s32 %s341, %s342
          %s344 = smul.addr %s343, 8
          %s345 = scalar_lea.hbm %s0, %s344
          %s346 = sshll.u32 %s345, 4
          %s347 = int_to_ptr.hbm [resolvable:$true] %s346
          %s348 = sshll.u32 %s337, 4
          %s349 = int_to_ptr.vmem [resolvable:$true] %s348
          %354 = dma.hbm_to_vmem [thread:$0]  %s347, 768, %s349, %s334, 128, 128, 8
        $region44: #{jpeg_forward.1} parent=39 // pred_fallthru
          _
      $region40: #{jpeg_forward.1} parent=5 // pred_fallthru
        _
      %p355 = scmp.le.s32.totalorder 1, %s22
      %p356 = scmp.lt.s32.totalorder %s22, 3
      %p357 = pnand %p355, %p356
      %p358 = pneg %p357
      // Predicated region
      $region45: #{jpeg_forward.1} parent=5 // pred_check
        _
      $region46: #{jpeg_forward.1} parent=5 // pred_check_branch
        %360 = sbr.rel (%p357) target = $region48
      $region47: #{jpeg_forward.1} parent=5 // pred_region
        %s361 = ssub.s32 %s22, 1
        %s362 = sand.u32 %s58, 1
        %s363 = scalar_lea.sflag [#allocation3], %s362
        %s364 = sand.u32 %s58, 1
        %s365 = smul.addr %s364, 48
        %s366 = scalar_lea.vmem [#allocation2], %s365
        // Predicated region
        $region49: #{jpeg_forward.1} parent=47 // pred_check
          %p367 = pneg %p71
        $region50: #{jpeg_forward.1} parent=47 // pred_check_branch
          %369 = sbr.rel (%p367) target = $region52
        $region51: #{jpeg_forward.1} parent=47 // pred_region
          %371 = dma.done %s363, 768
        $region52: #{jpeg_forward.1} parent=47 // pred_fallthru
          _
        // Predicated region
        $region53: #{jpeg_forward.1} parent=47 // pred_check
          %p372 = pneg %p92
        $region54: #{jpeg_forward.1} parent=47 // pred_check_branch
          %374 = sbr.rel (%p372) target = $region56
        $region55: #{jpeg_forward.1} parent=47 // pred_region
          %376 = dma.done [#allocation6], 128
        $region56: #{jpeg_forward.1} parent=47 // pred_fallthru
          _
        // Predicated region
        $region57: #{jpeg_forward.1} parent=47 // pred_check
          %p377 = pneg %p113
        $region58: #{jpeg_forward.1} parent=47 // pred_check_branch
          %379 = sbr.rel (%p377) target = $region60
        $region59: #{jpeg_forward.1} parent=47 // pred_region
          %381 = dma.done [#allocation6], 128
        $region60: #{jpeg_forward.1} parent=47 // pred_fallthru
          _
        // Predicated region
        $region61: #{jpeg_forward.1} parent=47 // pred_check
          %p382 = pneg %p134
        $region62: #{jpeg_forward.1} parent=47 // pred_check_branch
          %384 = sbr.rel (%p382) target = $region64
        $region63: #{jpeg_forward.1} parent=47 // pred_region
          %386 = dma.done [#allocation9], 128
        $region64: #{jpeg_forward.1} parent=47 // pred_fallthru
          _
        // Predicated region
        $region65: #{jpeg_forward.1} parent=47 // pred_check
          %p387 = pneg %p155
        $region66: #{jpeg_forward.1} parent=47 // pred_check_branch
          %389 = sbr.rel (%p387) target = $region68
        $region67: #{jpeg_forward.1} parent=47 // pred_region
          %391 = dma.done [#allocation9], 128
        $region68: #{jpeg_forward.1} parent=47 // pred_fallthru
          _
        // Predicated region
        $region69: #{jpeg_forward.1} parent=47 // pred_check
          %p392 = pneg %p176
        $region70: #{jpeg_forward.1} parent=47 // pred_check_branch
          %394 = sbr.rel (%p392) target = $region72
        $region71: #{jpeg_forward.1} parent=47 // pred_region
          %396 = dma.done [#allocation12], 768
        $region72: #{jpeg_forward.1} parent=47 // pred_fallthru
          _
        // Predicated region
        $region73: #{jpeg_forward.1} parent=47 // pred_check
          %p397 = pneg %p197
        $region74: #{jpeg_forward.1} parent=47 // pred_check_branch
          %399 = sbr.rel (%p397) target = $region76
        $region75: #{jpeg_forward.1} parent=47 // pred_region
          %401 = dma.done [#allocation12], 768
        $region76: #{jpeg_forward.1} parent=47 // pred_fallthru
          _
        %s402 = sand.u32 %s58, 1
        %s403 = scalar_lea.sflag [#allocation3], %s402
        %s404 = sand.u32 %s58, 1
        %s405 = smul.addr %s404, 48
        %s406 = scalar_lea.vmem [#allocation2], %s405
        %p407 = pneg %p71
        %p408 = pneg %p68
        %p409 = pneg %p92
        %p410 = pneg %p89
        %p411 = pneg %p113
        %p412 = pneg %p110
        %p413 = pneg %p134
        %p414 = pneg %p131
        %p415 = pneg %p155
        %p416 = pneg %p152
        %p417 = pneg %p176
        %p418 = pneg %p173
        %p419 = pneg %p197
        %p420 = pneg %p194
        %p421 = pneg %p227
        %p422 = pneg %p224
        %s423 = sand.u32 %s214, 1
        %s424 = scalar_lea.sflag [#allocation4], %s423
        %s425 = sand.u32 %s214, 1
        %s426 = smul.addr %s425, 48
        %s427 = scalar_lea.vmem [#allocation14], %s426
        %s428 = smul.u32 2, %s33
        %s429 = smul.u32 2, %s33
        %v431 = vld [vmem:[#allocation5] sm:$0xf]
        %v432 = vld [vmem:[#allocation5 + $0x4] sm:$0xf]
        %v433 = vld [vmem:[#allocation7] sm:$0xf]
        %v434 = vld [vmem:[#allocation7 + $0x4] sm:$0xf]
        %v435 = vld [vmem:[#allocation8] sm:$0xf]
        %v436 = vld [vmem:[#allocation8 + $0x4] sm:$0xf]
        %v437 = vld [vmem:[#allocation10] sm:$0xf]
        %v438 = vld [vmem:[#allocation10 + $0x4] sm:$0xf]
        %v439 = vld [vmem:[%s366] sm:$0xff]
        %v440 = vld [vmem:[%s366 + $0x8] sm:$0xff]
        %v441 = vmax.f32 %v439, 0.0
        %v442 = vmax.f32 %v440, 0.0
        %v443 = vmin.f32 %v441, 1.0
        %v444 = vmin.f32 %v442, 1.0
        %s445 = scalar_lea.vmem %s366, 16 [#allocation2]
        %v446 = vld [vmem:[%s445] sm:$0xff]
        %v447 = vld [vmem:[%s445 + $0x8] sm:$0xff]
        %v448 = vmax.f32 %v446, 0.0
        %v449 = vmax.f32 %v447, 0.0
        %v450 = vmin.f32 %v448, 1.0
        %v451 = vmin.f32 %v449, 1.0
        %s452 = scalar_lea.vmem %s366, 32 [#allocation2]
        %v453 = vld [vmem:[%s452] sm:$0xff]
        %v454 = vld [vmem:[%s452 + $0x8] sm:$0xff]
        %v455 = vmax.f32 %v453, 0.0
        %v456 = vmax.f32 %v454, 0.0
        %v457 = vmin.f32 %v455, 1.0
        %v458 = vmin.f32 %v456, 1.0
        %v459 = vmul.f32 %v443, 76.245
        %v460 = vmul.f32 %v444, 76.245
        %v461 = vmul.f32 %v450, 149.685
        %v462 = vmul.f32 %v451, 149.685
        %v463 = vadd.f32 %v459, %v461
        %v464 = vadd.f32 %v460, %v462
        %v465 = vmul.f32 %v457, 29.07
        %v466 = vmul.f32 %v458, 29.07
        %v467 = vadd.f32 %v463, %v465
        %v468 = vadd.f32 %v464, %v466
        %v469 = vsub.f32 %v467, 128.0
        %v470 = vsub.f32 %v468, 128.0
        %v471 = vmul.f32 %v443, -43.02768
        %v472 = vmul.f32 %v444, -43.02768
        %v473 = vmul.f32 %v450, -84.47232
        %v474 = vmul.f32 %v451, -84.47232
        %v475 = vadd.f32 %v471, %v473
        %v476 = vadd.f32 %v472, %v474
        %v477 = vmul.f32 %v457, 127.5
        %v478 = vmul.f32 %v458, 127.5
        %v479 = vadd.f32 %v475, %v477
        %v480 = vadd.f32 %v476, %v478
        %v481 = vmul.f32 %v443, 127.5
        %v482 = vmul.f32 %v444, 127.5
        %v483 = vmul.f32 %v450, -106.76544
        %v484 = vmul.f32 %v451, -106.76544
        %v485 = vadd.f32 %v481, %v483
        %v486 = vadd.f32 %v482, %v484
        %v487 = vmul.f32 %v457, -20.73456
        %v488 = vmul.f32 %v458, -20.73456
        %v489 = vadd.f32 %v485, %v487
        %v490 = vadd.f32 %v486, %v488
        %v491 = vpack.c.bf16 %v470, %v469
        %v494 = vunpack.c.l.b16 %v431
        %v495 = vunpack.c.l.b16 %v432
        %v496 = vpack.c.b16 %v495, %v494
        %vm497 = vcmask 130048
        %v499 = vsel %vm497, %v496, 0
        %501 = vmatpush.bf16.msra.mxu0 0
        %502 = vmatpush.bf16.msra.mxu0 0
        %503 = vmatpush.bf16.msra.mxu0 0
        %504 = vmatpush.bf16.msra.mxu0 0
        %505 = vmatpush.bf16.msra.mxu0 0
        %506 = vmatpush.bf16.msra.mxu0 0
        %507 = vmatpush.bf16.msra.mxu0 0
        %508 = vmatpush.bf16.msra.mxu0 %v491
        %509 = vmatmul.bf16.gmra.mxu0 %v499
        %v510 = vpop.f32.mrf.mxu0
        %v511 = vadd.f32 0.0, %v510
        %v512 = vpop.f32.mrf.mxu0
        %v513 = vadd.f32 0.0, %v512
        %514 = vdwg.mxu0
        %v515 = vpack.c.bf16 %v513, %v511
        %v518 = vunpack.c.l.b16 %v435
        %v519 = vunpack.c.l.b16 %v436
        %v520 = vpack.c.b16 %v519, %v518
        %v523 = vsel %vm497, %v515, 0
        %525 = vmatpush.bf16.msra.mxu0 0
        %526 = vmatpush.bf16.msra.mxu0 0
        %527 = vmatpush.bf16.msra.mxu0 0
        %528 = vmatpush.bf16.msra.mxu0 0
        %529 = vmatpush.bf16.msra.mxu0 0
        %530 = vmatpush.bf16.msra.mxu0 0
        %531 = vmatpush.bf16.msra.mxu0 0
        %532 = vmatpush.bf16.msra.mxu0 %v520
        %533 = vmatmul.bf16.gmra.mxu0 %v523
        %v534 = vpop.f32.mrf.mxu0
        %v535 = vadd.f32 0.0, %v534
        %v536 = vpop.f32.mrf.mxu0
        %v537 = vadd.f32 0.0, %v536
        %538 = vdwg.mxu0
        %v539 = vld [vmem:[#allocation11] sm:$0xff]
        %v540 = vld [vmem:[#allocation11 + $0x8] sm:$0xff]
        %v541 = vmul.f32 %v535, %v539
        %v542 = vmul.f32 %v537, %v540
        %v543 = vround.ne.pseudo %v541
        %v544 = vround.ne.pseudo %v542
        %v545 = vld [vmem:[#allocation13] sm:$0xff]
        %v546 = vld [vmem:[#allocation13 + $0x8] sm:$0xff]
        %v547 = vmul.f32 %v543, %v545
        %v548 = vmul.f32 %v544, %v546
        %v549 = vpack.c.bf16 %v548, %v547
        %v552 = vunpack.c.l.b16 %v433
        %v553 = vunpack.c.l.b16 %v434
        %v554 = vpack.c.b16 %v553, %v552
        %v556 = vsel %vm497, %v554, 0
        %558 = vmatpush.bf16.msra.mxu0 0
        %559 = vmatpush.bf16.msra.mxu0 0
        %560 = vmatpush.bf16.msra.mxu0 0
        %561 = vmatpush.bf16.msra.mxu0 0
        %562 = vmatpush.bf16.msra.mxu0 0
        %563 = vmatpush.bf16.msra.mxu0 0
        %564 = vmatpush.bf16.msra.mxu0 0
        %565 = vmatpush.bf16.msra.mxu0 %v549
        %566 = vmatmul.bf16.gmra.mxu0 %v556
        %v567 = vpop.f32.mrf.mxu0
        %v568 = vadd.f32 0.0, %v567
        %v569 = vpop.f32.mrf.mxu0
        %v570 = vadd.f32 0.0, %v569
        %571 = vdwg.mxu0
        %v572 = vpack.c.bf16 %v570, %v568
        %v575 = vunpack.c.l.b16 %v437
        %v576 = vunpack.c.l.b16 %v438
        %v577 = vpack.c.b16 %v576, %v575
        %v580 = vsel %vm497, %v572, 0
        %582 = vmatpush.bf16.msra.mxu0 0
        %583 = vmatpush.bf16.msra.mxu0 0
        %584 = vmatpush.bf16.msra.mxu0 0
        %585 = vmatpush.bf16.msra.mxu0 0
        %586 = vmatpush.bf16.msra.mxu0 0
        %587 = vmatpush.bf16.msra.mxu0 0
        %588 = vmatpush.bf16.msra.mxu0 0
        %589 = vmatpush.bf16.msra.mxu0 %v577
        %590 = vmatmul.bf16.gmra.mxu0 %v580
        %v591 = vpop.f32.mrf.mxu0
        %v592 = vadd.f32 128.0, %v591
        %v593 = vpop.f32.mrf.mxu0
        %v594 = vadd.f32 128.0, %v593
        %595 = vdwg.mxu0
        %v596 = vpack.c.bf16 %v480, %v479
        %597 = vmatpush.bf16.msra.mxu0 0
        %598 = vmatpush.bf16.msra.mxu0 0
        %599 = vmatpush.bf16.msra.mxu0 0
        %600 = vmatpush.bf16.msra.mxu0 0
        %601 = vmatpush.bf16.msra.mxu0 0
        %602 = vmatpush.bf16.msra.mxu0 0
        %603 = vmatpush.bf16.msra.mxu0 0
        %604 = vmatpush.bf16.msra.mxu0 %v596
        %605 = vmatmul.bf16.gmra.mxu0 %v499
        %v606 = vpop.f32.mrf.mxu0
        %v607 = vadd.f32 0.0, %v606
        %v608 = vpop.f32.mrf.mxu0
        %v609 = vadd.f32 0.0, %v608
        %610 = vdwg.mxu0
        %v611 = vpack.c.bf16 %v609, %v607
        %v613 = vsel %vm497, %v611, 0
        %615 = vmatpush.bf16.msra.mxu0 0
        %616 = vmatpush.bf16.msra.mxu0 0
        %617 = vmatpush.bf16.msra.mxu0 0
        %618 = vmatpush.bf16.msra.mxu0 0
        %619 = vmatpush.bf16.msra.mxu0 0
        %620 = vmatpush.bf16.msra.mxu0 0
        %621 = vmatpush.bf16.msra.mxu0 0
        %622 = vmatpush.bf16.msra.mxu0 %v520
        %623 = vmatmul.bf16.gmra.mxu0 %v613
        %v624 = vpop.f32.mrf.mxu0
        %v625 = vadd.f32 0.0, %v624
        %v626 = vpop.f32.mrf.mxu0
        %v627 = vadd.f32 0.0, %v626
        %628 = vdwg.mxu0
        %s629 = scalar_lea.vmem [#allocation11], 16
        %v630 = vld [vmem:[%s629] sm:$0xff]
        %v631 = vld [vmem:[%s629 + $0x8] sm:$0xff]
        %v632 = vmul.f32 %v625, %v630
        %v633 = vmul.f32 %v627, %v631
        %v634 = vround.ne.pseudo %v632
        %v635 = vround.ne.pseudo %v633
        %s636 = scalar_lea.vmem [#allocation13], 16
        %v637 = vld [vmem:[%s636] sm:$0xff]
        %v638 = vld [vmem:[%s636 + $0x8] sm:$0xff]
        %v639 = vmul.f32 %v634, %v637
        %v640 = vmul.f32 %v635, %v638
        %v641 = vpack.c.bf16 %v640, %v639
        %642 = vmatpush.bf16.msra.mxu0 0
        %643 = vmatpush.bf16.msra.mxu0 0
        %644 = vmatpush.bf16.msra.mxu0 0
        %645 = vmatpush.bf16.msra.mxu0 0
        %646 = vmatpush.bf16.msra.mxu0 0
        %647 = vmatpush.bf16.msra.mxu0 0
        %648 = vmatpush.bf16.msra.mxu0 0
        %649 = vmatpush.bf16.msra.mxu0 %v641
        %650 = vmatmul.bf16.gmra.mxu0 %v556
        %v651 = vpop.f32.mrf.mxu0
        %v652 = vadd.f32 0.0, %v651
        %v653 = vpop.f32.mrf.mxu0
        %v654 = vadd.f32 0.0, %v653
        %655 = vdwg.mxu0
        %v656 = vpack.c.bf16 %v654, %v652
        %v658 = vsel %vm497, %v656, 0
        %660 = vmatpush.bf16.msra.mxu0 0
        %661 = vmatpush.bf16.msra.mxu0 0
        %662 = vmatpush.bf16.msra.mxu0 0
        %663 = vmatpush.bf16.msra.mxu0 0
        %664 = vmatpush.bf16.msra.mxu0 0
        %665 = vmatpush.bf16.msra.mxu0 0
        %666 = vmatpush.bf16.msra.mxu0 0
        %667 = vmatpush.bf16.msra.mxu0 %v577
        %668 = vmatmul.bf16.gmra.mxu0 %v658
        %v669 = vpop.f32.mrf.mxu0
        %v670 = vadd.f32 0.0, %v669
        %v671 = vpop.f32.mrf.mxu0
        %v672 = vadd.f32 0.0, %v671
        %673 = vdwg.mxu0
        %v674 = vpack.c.bf16 %v490, %v489
        %675 = vmatpush.bf16.msra.mxu0 0
        %676 = vmatpush.bf16.msra.mxu0 0
        %677 = vmatpush.bf16.msra.mxu0 0
        %678 = vmatpush.bf16.msra.mxu0 0
        %679 = vmatpush.bf16.msra.mxu0 0
        %680 = vmatpush.bf16.msra.mxu0 0
        %681 = vmatpush.bf16.msra.mxu0 0
        %682 = vmatpush.bf16.msra.mxu0 %v674
        %683 = vmatmul.bf16.gmra.mxu0 %v499
        %v684 = vpop.f32.mrf.mxu0
        %v685 = vadd.f32 0.0, %v684
        %v686 = vpop.f32.mrf.mxu0
        %v687 = vadd.f32 0.0, %v686
        %688 = vdwg.mxu0
        %v689 = vpack.c.bf16 %v687, %v685
        %v691 = vsel %vm497, %v689, 0
        %693 = vmatpush.bf16.msra.mxu0 0
        %694 = vmatpush.bf16.msra.mxu0 0
        %695 = vmatpush.bf16.msra.mxu0 0
        %696 = vmatpush.bf16.msra.mxu0 0
        %697 = vmatpush.bf16.msra.mxu0 0
        %698 = vmatpush.bf16.msra.mxu0 0
        %699 = vmatpush.bf16.msra.mxu0 0
        %700 = vmatpush.bf16.msra.mxu0 %v520
        %701 = vmatmul.bf16.gmra.mxu0 %v691
        %v702 = vpop.f32.mrf.mxu0
        %v703 = vadd.f32 0.0, %v702
        %v704 = vpop.f32.mrf.mxu0
        %v705 = vadd.f32 0.0, %v704
        %706 = vdwg.mxu0
        %s707 = scalar_lea.vmem [#allocation11], 32
        %v708 = vld [vmem:[%s707] sm:$0xff]
        %v709 = vld [vmem:[%s707 + $0x8] sm:$0xff]
        %v710 = vmul.f32 %v703, %v708
        %v711 = vmul.f32 %v705, %v709
        %v712 = vround.ne.pseudo %v710
        %v713 = vround.ne.pseudo %v711
        %s714 = scalar_lea.vmem [#allocation13], 32
        %v715 = vld [vmem:[%s714] sm:$0xff]
        %v716 = vld [vmem:[%s714 + $0x8] sm:$0xff]
        %v717 = vmul.f32 %v712, %v715
        %v718 = vmul.f32 %v713, %v716
        %v719 = vpack.c.bf16 %v718, %v717
        %720 = vmatpush.bf16.msra.mxu0 0
        %721 = vmatpush.bf16.msra.mxu0 0
        %722 = vmatpush.bf16.msra.mxu0 0
        %723 = vmatpush.bf16.msra.mxu0 0
        %724 = vmatpush.bf16.msra.mxu0 0
        %725 = vmatpush.bf16.msra.mxu0 0
        %726 = vmatpush.bf16.msra.mxu0 0
        %727 = vmatpush.bf16.msra.mxu0 %v719
        %728 = vmatmul.bf16.gmra.mxu0 %v556
        %v729 = vpop.f32.mrf.mxu0
        %v730 = vadd.f32 0.0, %v729
        %v731 = vpop.f32.mrf.mxu0
        %v732 = vadd.f32 0.0, %v731
        %733 = vdwg.mxu0
        %v734 = vpack.c.bf16 %v732, %v730
        %v736 = vsel %vm497, %v734, 0
        %738 = vmatpush.bf16.msra.mxu0 0
        %739 = vmatpush.bf16.msra.mxu0 0
        %740 = vmatpush.bf16.msra.mxu0 0
        %741 = vmatpush.bf16.msra.mxu0 0
        %742 = vmatpush.bf16.msra.mxu0 0
        %743 = vmatpush.bf16.msra.mxu0 0
        %744 = vmatpush.bf16.msra.mxu0 0
        %745 = vmatpush.bf16.msra.mxu0 %v577
        %746 = vmatmul.bf16.gmra.mxu0 %v736
        %v747 = vpop.f32.mrf.mxu0
        %v748 = vadd.f32 0.0, %v747
        %v749 = vpop.f32.mrf.mxu0
        %v750 = vadd.f32 0.0, %v749
        %751 = vdwg.mxu0
        %v752 = vmul.f32 %v748, 1.402
        %v753 = vmul.f32 %v750, 1.402
        %v754 = vadd.f32 %v592, %v752
        %v755 = vadd.f32 %v594, %v753
        %v756 = vmul.f32 %v670, 0.344136
        %v757 = vmul.f32 %v672, 0.344136
        %v758 = vsub.f32 %v592, %v756
        %v759 = vsub.f32 %v594, %v757
        %v760 = vmul.f32 %v748, 0.714136
        %v761 = vmul.f32 %v750, 0.714136
        %v762 = vsub.f32 %v758, %v760
        %v763 = vsub.f32 %v759, %v761
        %v764 = vmul.f32 %v670, 1.772
        %v765 = vmul.f32 %v672, 1.772
        %v766 = vadd.f32 %v592, %v764
        %v767 = vadd.f32 %v594, %v765
        %v768 = vmax.f32 %v754, 0.0
        %v769 = vmax.f32 %v755, 0.0
        %v770 = vmin.f32 %v768, 255.0
        %v771 = vmin.f32 %v769, 255.0
        %v772 = vround.ne.pseudo %v770
        %v773 = vround.ne.pseudo %v771
        %v774 = vmul.f32 %v772, 0.003921569
        %v775 = vmul.f32 %v773, 0.003921569
        %776 = vst.msk [vmem:[%s427] sm:$0xff] %vm497, %v774
        %777 = vst.msk [vmem:[%s427 + $0x8] sm:$0xff] %vm497, %v775
        %v778 = vmax.f32 %v762, 0.0
        %v779 = vmax.f32 %v763, 0.0
        %v780 = vmin.f32 %v778, 255.0
        %v781 = vmin.f32 %v779, 255.0
        %v782 = vround.ne.pseudo %v780
        %v783 = vround.ne.pseudo %v781
        %v784 = vmul.f32 %v782, 0.003921569
        %v785 = vmul.f32 %v783, 0.003921569
        %s786 = scalar_lea.vmem %s427, 16 [#allocation14]
        %787 = vst.msk [vmem:[%s786] sm:$0xff] %vm497, %v784
        %788 = vst.msk [vmem:[%s786 + $0x8] sm:$0xff] %vm497, %v785
        %v789 = vmax.f32 %v766, 0.0
        %v790 = vmax.f32 %v767, 0.0
        %v791 = vmin.f32 %v789, 255.0
        %v792 = vmin.f32 %v790, 255.0
        %v793 = vround.ne.pseudo %v791
        %v794 = vround.ne.pseudo %v792
        %v795 = vmul.f32 %v793, 0.003921569
        %v796 = vmul.f32 %v794, 0.003921569
        %s797 = scalar_lea.vmem %s427, 32 [#allocation14]
        %798 = vst.msk [vmem:[%s797] sm:$0xff] %vm497, %v795
        %799 = vst.msk [vmem:[%s797 + $0x8] sm:$0xff] %vm497, %v796
        %s800 = sand.u32 %s214, 1
        %s801 = scalar_lea.sflag [#allocation4], %s800
        %s802 = sand.u32 %s214, 1
        %s803 = smul.addr %s802, 48
        %s804 = scalar_lea.vmem [#allocation14], %s803
        // Predicated region
        $region77: #{jpeg_forward.1} parent=47 // pred_check
          %p805 = pneg %p224
        $region78: #{jpeg_forward.1} parent=47 // pred_check_branch
          %807 = sbr.rel (%p805) target = $region80
        $region79: #{jpeg_forward.1} parent=47 // pred_region
          %s808 = smul.u32 2, %s33
          %810 = vsyncadd %s801, 0
          %s811 = sadd.s32 %s34, %s808
          %s812 = smul.addr %s32, 6
          %s813 = sadd.s32 %s811, %s812
          %s814 = smul.addr %s813, 8
          %s815 = scalar_lea.hbm %s7, %s814
          %s816 = sshll.u32 %s804, 4
          %s817 = int_to_ptr.vmem [resolvable:$true] %s816
          %s818 = sshll.u32 %s815, 4
          %s819 = int_to_ptr.hbm [resolvable:$true] %s818
          %824 = dma.vmem_to_hbm [thread:$0]  %s817, 768, %s819, %s801, 128, 128, 8
        $region80: #{jpeg_forward.1} parent=47 // pred_fallthru
          _
      $region48: #{jpeg_forward.1} parent=5 // pred_fallthru
        _
      %p825 = scmp.le.s32.totalorder 2, %s22
      // Predicated region
      $region81: #{jpeg_forward.1} parent=5 // pred_check
        %p826 = pneg %p825
      $region82: #{jpeg_forward.1} parent=5 // pred_check_branch
        %828 = sbr.rel (%p826) target = $region84
      $region83: #{jpeg_forward.1} parent=5 // pred_region
        %s829 = ssub.s32 %s22, 2
        // Predicated region
        $region85: #{jpeg_forward.1} parent=83 // pred_check
          %p830 = pneg %p230
        $region86: #{jpeg_forward.1} parent=83 // pred_check_branch
          %832 = sbr.rel (%p830) target = $region88
        $region87: #{jpeg_forward.1} parent=83 // pred_region
          %s833 = sand.u32 %s215, 1
          %s834 = scalar_lea.sflag [#allocation4], %s833
          %s835 = sand.u32 %s215, 1
          %s836 = smul.addr %s835, 48
          %s837 = scalar_lea.vmem [#allocation14], %s836
          %839 = dma.done %s834, 768
        $region88: #{jpeg_forward.1} parent=83 // pred_fallthru
          _
      $region84: #{jpeg_forward.1} parent=5 // pred_fallthru
        _
    $region6: #{jpeg_forward.1} parent=1 // loop_footer
      %s26 = sadd.s32 1, %s22
    $region7: #{jpeg_forward.1} parent=1 // loop_footer_branch
      %21 = sbr.rel target = $region3
    $region8: #{jpeg_forward.1} parent=1 // loop_exit
      _
    %840 = vsyncpa [#allocation3], 1
    %s841 = scalar_lea.sflag [#allocation3], 1
    %842 = vsyncpa %s841, 1
    %843 = vsyncpa [#allocation6], 1
    %844 = vsyncpa [#allocation9], 1
    %845 = vsyncpa [#allocation12], 1
    %846 = vsyncpa [#allocation4], 1
    %s847 = scalar_lea.sflag [#allocation4], 1
    %848 = vsyncpa %s847, 1

</llo_original>
